<compile_context>
chip_gen: v5e
topology: v5e:2x2
jax: 0.10.0
libtpu: 0.0.40
codegen_flags: <defaults>
</compile_context>

<pallas_src>
import jax
import jax.numpy as jnp
from jax.experimental import pallas as pl
from jax.experimental.pallas import tpu as pltpu

LANE = 128
SUBLANE = 8
MAX_SPATIAL_TILE = 512   # >=512 lanes amortizes the ~0.35us per-grid-step overhead
MAX_ROW_TILE = 256       # keeps 2 x (rows x TS) bf16 x-buffers well under the
                         # v5e 16 MiB scoped-VMEM default (and v7x's 64 MiB VMEM)


def _round_up(x, m):
    return ((x + m - 1) // m) * m


def _pick_spatial_tile(s):
    """Largest multiple of 128 that divides S, capped at MAX_SPATIAL_TILE."""
    if s % LANE != 0:
        return s                      # full-extent fallback (allowed by BlockSpec)
    ts = min(s, MAX_SPATIAL_TILE)
    while s % ts != 0:
        ts -= LANE
    return ts


def _pick_batch_tile(b, c):
    """Largest TB dividing B with TB*C a multiple of 8 (sublane-dense x rows)."""
    best = None
    for tb in range(1, b + 1):
        if b % tb == 0 and (tb * c) % SUBLANE == 0 and tb * c <= MAX_ROW_TILE:
            best = tb
    if best is None:
        return b                      # full-extent fallback (block == array dim)
    return best


def basenet_kernel(x_ref, wt_ref, g_ref, b_ref, out_ref, acc_ref):
    """One (batch-tile, spatial-tile) grid step.

    x_ref:   (TBC, TS)   bf16 tile of the flattened (B*C, H*W) input
    wt_ref:  (TBC, NCp)  fused head weight, row-tiled: wt[r, :] = W_comb[r % C, :]
    g_ref:   (TB, TBC)   channel-group-sum selector with the 1/S scale folded in
    b_ref:   (1, NCp)    fused head bias (lane-padded)
    out_ref: (TB, NCp)   f32 logits (lane-padded)
    acc_ref: (TBC, 1)    f32 VMEM scratch: running spatial sums
    """
    s = pl.program_id(1)

    @pl.when(s == 0)
    def _init():
        acc_ref[...] = jnp.zeros_like(acc_ref)

    # Spatial partial sum for this tile; upcast bf16 -> f32 BEFORE reducing so
    # the accumulation over large S stays in f32.
    acc_ref[...] += jnp.sum(x_ref[...].astype(jnp.float32), axis=-1, keepdims=True)

    @pl.when(s == pl.num_programs(1) - 1)
    def _finalize():
        # contrib[r, n] = (sum_s x_flat[row r, s]) * W_comb[r % C, n]
        contrib = acc_ref[...] * wt_ref[...]                      # (TBC, NCp)
        # Group-sum the C channel rows of each batch element (g carries 1/S):
        #   out[t, n] = sum_c mean_s(x[t, c, s]) * W_comb[c, n] + b_comb[n]
        out = jnp.dot(g_ref[...], contrib,
                      preferred_element_type=jnp.float32) + b_ref[...]
        out_ref[...] = out.astype(out_ref.dtype)


def prepare_basenet(w_embed, b_embed, w_last, b_last, *, batch, channels, height, width):
    """Fuse / pad / tile the weights once (hoisted out of the per-call path)."""
    c, _ = w_embed.shape
    assert c == channels
    nc = w_last.shape[1]
    s = height * width
    ncp = max(LANE, _round_up(nc, LANE))
    tb = _pick_batch_tile(batch, c)
    ts = _pick_spatial_tile(s)
    tbc = tb * c

    # Fused head: pooled_x @ (We @ Wl) + (be @ Wl + bl).  Exact only while the
    # backbone stub is a pure linear map (same caveat as pool-before-project).
    w_comb = jnp.dot(w_embed, w_last)                               # (C, NC)
    b_comb = jnp.dot(b_embed[None, :], w_last) + b_last[None, :]    # (1, NC)

    # Lane padding to 128 -> lane-dense MXU tiles and unmasked output stores.
    w_comb_p = jnp.pad(w_comb, ((0, 0), (0, ncp - nc)))             # (C, NCp)
    b_comb_p = jnp.pad(b_comb, ((0, 0), (0, ncp - nc)))             # (1, NCp)

    # Row-tiled weight matching the flattened (TB*C, .) layout.
    w_tiled = jnp.tile(w_comb_p, (tb, 1))                           # (TBC, NCp)

    # Channel-group-sum selector: g[t, r] = 1/S if r // C == t else 0.
    g = (jnp.arange(tbc)[None, :] // c == jnp.arange(tb)[:, None]).astype(
        jnp.float32
    ) * (1.0 / s)                                                   # (TB, TBC)

    params = (w_tiled, g, b_comb_p)
    cfg = dict(batch=batch, channels=c, spatial=s, num_classes=nc,
               ncp=ncp, tb=tb, ts=ts, tbc=tbc)
    return params, cfg


def basenet_forward(x_nchw, params, cfg):
    """x_nchw: (B, C, H, W) float32.  Returns (logits, None) like the module."""
    w_tiled, g, b_comb_p = params
    B, C, H, W = x_nchw.shape
    S = H * W
    assert B == cfg["batch"] and C == cfg["channels"] and S == cfg["spatial"]
    tb, ts, tbc = cfg["tb"], cfg["ts"], cfg["tbc"]
    ncp, nc = cfg["ncp"], cfg["num_classes"]
    n_b, n_s = B // tb, S // ts

    # Free contiguous reshape NCHW -> (B*C, H*W); cast the dominant HBM stream
    # to bf16 (in production feed bf16 activations directly to skip the cast).
    x2 = x_nchw.reshape(B * C, S).astype(jnp.bfloat16)

    flops = 2 * B * C * S + 2 * n_b * tb * tbc * ncp
    bytes_accessed = (x2.size * 2 + w_tiled.size * 4 + g.size * 4
                      + b_comb_p.size * 4 + B * ncp * 4)

    out_p = pl.pallas_call(
        basenet_kernel,
        out_shape=jax.ShapeDtypeStruct((B, ncp), jnp.float32),
        grid_spec=pltpu.PrefetchScalarGridSpec(
            num_scalar_prefetch=0,
            grid=(n_b, n_s),                       # reduction (S) axis innermost
            in_specs=[
                pl.BlockSpec((tbc, ts), lambda b, s: (b, s)),
                pl.BlockSpec((tbc, ncp), lambda b, s: (0, 0)),
                pl.BlockSpec((tb, tbc), lambda b, s: (0, 0)),
                pl.BlockSpec((1, ncp), lambda b, s: (0, 0)),
            ],
            out_specs=pl.BlockSpec((tb, ncp), lambda b, s: (b, 0)),
            scratch_shapes=[pltpu.VMEM((tbc, 1), jnp.float32)],
        ),
        compiler_params=pltpu.CompilerParams(
            dimension_semantics=("parallel", "arbitrary"),
            vmem_limit_bytes=32 * 1024 * 1024,
        ),
        cost_estimate=pl.CostEstimate(
            flops=flops, transcendentals=0, bytes_accessed=bytes_accessed
        ),
    )(x2, w_tiled, g, b_comb_p)

    # Slice off the lane padding -> (B, num_classes); module returns (out, None).
    return out_p[:, :nc], None


def make_basenet_forward(params, cfg):
    @jax.jit
    def fwd(x):
        return basenet_forward(x, params, cfg)
    return fwd


def make_params(key, c_in, feat_dim, num_classes):
    k_we, k_wl = jax.random.split(key)
    # Stub backbone params (deterministic).
    w_embed = jax.random.normal(k_we, (c_in, feat_dim), jnp.float32) * (
        1.0 / jnp.sqrt(c_in)
    )
    b_embed = jnp.zeros((feat_dim,), jnp.float32)
    # last_layer: nn.init.kaiming_normal_(weight, 1) -> std ~ 1/sqrt(fan_in)
    w_last = jax.random.normal(k_wl, (feat_dim, num_classes), jnp.float32) * (
        1.0 / jnp.sqrt(feat_dim)
    )
    # nn.init.constant_(bias, 0)
    b_last = jnp.zeros((num_classes,), jnp.float32)
    return w_embed, b_embed, w_last, b_last


if __name__ == "__main__":
    B, C, H, W = 2, 4, 16, 16
    FEAT_DIM = 32
    NUM_CLASSES = 8

    key = jax.random.PRNGKey(0)
    k_x1, k_x2, k_p = jax.random.split(key, 3)
    w_embed, b_embed, w_last, b_last = make_params(k_p, C, FEAT_DIM, NUM_CLASSES)

    # Pure-JAX reference with the original (unfused) dataflow:
    # full feature map -> spatial mean -> linear head, all in f32.
    def reference(x):
        b, c, h, w = x.shape
        x_bsc = jnp.transpose(x, (0, 2, 3, 1)).reshape(b, h * w, c)
        feats = jnp.einsum("bsc,cd->bsd", x_bsc, w_embed) + b_embed
        pooled = feats.mean(axis=1)
        return pooled @ w_last + b_last

    # Case 1: the spec'd small shape (single spatial grid step).
    x1 = jax.random.normal(k_x1, (B, C, H, W), jnp.float32)
    params1, cfg1 = prepare_basenet(w_embed, b_embed, w_last, b_last,
                                    batch=B, channels=C, height=H, width=W)
    fwd1 = make_basenet_forward(params1, cfg1)
    out1, aux1 = fwd1(x1)
    out1 = jax.block_until_ready(out1)
    assert out1.shape == (B, NUM_CLASSES)
    assert aux1 is None
    # bf16 input stream + f32 accumulation -> agree with the f32 reference to ~1e-4.
    assert jnp.allclose(out1, reference(x1), atol=1e-2, rtol=1e-2)

    # Case 2: larger spatial extent -> exercises the multi-step S-axis
    # accumulator (pl.when init/finalize) with 512-wide spatial tiles.
    H2 = W2 = 32
    x2 = jax.random.normal(k_x2, (B, C, H2, W2), jnp.float32)
    params2, cfg2 = prepare_basenet(w_embed, b_embed, w_last, b_last,
                                    batch=B, channels=C, height=H2, width=W2)
    fwd2 = make_basenet_forward(params2, cfg2)
    out2, aux2 = fwd2(x2)
    out2 = jax.block_until_ready(out2)
    assert out2.shape == (B, NUM_CLASSES)
    assert aux2 is None
    assert jnp.allclose(out2, reference(x2), atol=1e-2, rtol=1e-2)

    print("KERNEL_OK")
</pallas_src>

<mosaic_0001>
module attributes {stable_mosaic.version = 11 : i64} {
  func.func @basenet_kernel(%arg0: i32, %arg1: i32, %arg2: memref<8x256xbf16, #tpu.memory_space<vmem>>, %arg3: memref<8x128xf32, #tpu.memory_space<vmem>>, %arg4: memref<2x8xf32, #tpu.memory_space<vmem>>, %arg5: memref<1x128xf32, #tpu.memory_space<vmem>>, %arg6: memref<2x128xf32, #tpu.memory_space<vmem>>, %arg7: memref<8x1xf32, #tpu.memory_space<vmem>>) attributes {dimension_semantics = [#tpu.dimension_semantics<parallel>, #tpu.dimension_semantics<arbitrary>], iteration_bounds = array<i64: 1, 1>, scalar_prefetch = 0 : i64, scratch_operands = 1 : i64, tpu.core_type = #tpu.core_type<tc>, window_params = [{transform_indices = @transform_0, window_bounds = array<i64: 8, 256>}, {pipeline_mode = #tpu.pipeline_mode<synchronous>, transform_indices = @transform_1, window_bounds = array<i64: 8, 128>}, {pipeline_mode = #tpu.pipeline_mode<synchronous>, transform_indices = @transform_2, window_bounds = array<i64: 2, 8>}, {pipeline_mode = #tpu.pipeline_mode<synchronous>, transform_indices = @transform_3, window_bounds = array<i64: 1, 128>}, {transform_indices = @transform_4, window_bounds = array<i64: 2, 128>}]} {
    %c0_i32 = arith.constant 0 : i32
    %0 = arith.cmpi eq, %arg1, %c0_i32 : i32
    %1 = arith.extui %0 : i1 to i32
    %c0_i32_0 = arith.constant 0 : i32
    %2 = arith.cmpi ne, %1, %c0_i32_0 : i32
    scf.if %2 {
      %cst_8 = arith.constant 0.000000e+00 : f32
      %13 = vector.broadcast %cst_8 : f32 to vector<8x1xf32>
      %c0_9 = arith.constant 0 : index
      %c0_10 = arith.constant 0 : index
      %14 = vector.load %arg7[%c0_9, %c0_10] : memref<8x1xf32, #tpu.memory_space<vmem>>, vector<8x1xf32>
      tpu.vector_store %arg7[%c0_9, %c0_10], %13 {strides = array<i32>} : memref<8x1xf32, #tpu.memory_space<vmem>>, vector<8x1xf32>,
    } else {
    }
    %c0 = arith.constant 0 : index
    %c0_1 = arith.constant 0 : index
    %3 = vector.load %arg7[%c0, %c0_1] : memref<8x1xf32, #tpu.memory_space<vmem>>, vector<8x1xf32>
    %c0_2 = arith.constant 0 : index
    %c0_3 = arith.constant 0 : index
    %4 = vector.load %arg2[%c0_2, %c0_3] : memref<8x256xbf16, #tpu.memory_space<vmem>>, vector<8x256xbf16>
    %5 = arith.extf %4 : vector<8x256xbf16> to vector<8x256xf32>
    %cst = arith.constant dense<0.000000e+00> : vector<8xf32>
    %6 = vector.multi_reduction <add>, %5, %cst [1] : vector<8x256xf32> to vector<8xf32>
    %7 = vector.shape_cast %6 : vector<8xf32> to vector<8x1xf32>
    %8 = arith.addf %3, %7 : vector<8x1xf32>
    %c0_4 = arith.constant 0 : index
    %c0_5 = arith.constant 0 : index
    %9 = vector.load %arg7[%c0_4, %c0_5] : memref<8x1xf32, #tpu.memory_space<vmem>>, vector<8x1xf32>
    tpu.vector_store %arg7[%c0_4, %c0_5], %8 {strides = array<i32>} : memref<8x1xf32, #tpu.memory_space<vmem>>, vector<8x1xf32>,
    %c0_i32_6 = arith.constant 0 : i32
    %10 = arith.cmpi eq, %arg1, %c0_i32_6 : i32
    %11 = arith.extui %10 : i1 to i32
    %c0_i32_7 = arith.constant 0 : i32
    %12 = arith.cmpi ne, %11, %c0_i32_7 : i32
    scf.if %12 {
      %c0_8 = arith.constant 0 : index
      %c0_9 = arith.constant 0 : index
      %13 = vector.load %arg7[%c0_8, %c0_9] : memref<8x1xf32, #tpu.memory_space<vmem>>, vector<8x1xf32>
      %c0_10 = arith.constant 0 : index
      %c0_11 = arith.constant 0 : index
      %14 = vector.load %arg3[%c0_10, %c0_11] : memref<8x128xf32, #tpu.memory_space<vmem>>, vector<8x128xf32>
      %15 = vector.broadcast %13 : vector<8x1xf32> to vector<8x128xf32>
      %16 = arith.mulf %15, %14 : vector<8x128xf32>
      %c0_12 = arith.constant 0 : index
      %c0_13 = arith.constant 0 : index
      %17 = vector.load %arg4[%c0_12, %c0_13] : memref<2x8xf32, #tpu.memory_space<vmem>>, vector<2x8xf32>
      %cst_14 = arith.constant dense<0.000000e+00> : vector<2x128xf32>
      %18 = tpu.matmul %17, %16, %cst_14 {dimension_numbers = #tpu.dot_dimension_numbers<[1], [0], [0], [1], [0, 0, 1, 1], [], []>} : vector<2x8xf32>, vector<8x128xf32>, vector<2x128xf32> -> vector<2x128xf32>
      %c0_15 = arith.constant 0 : index
      %c0_16 = arith.constant 0 : index
      %19 = vector.load %arg5[%c0_15, %c0_16] : memref<1x128xf32, #tpu.memory_space<vmem>>, vector<1x128xf32>
      %20 = vector.broadcast %19 : vector<1x128xf32> to vector<2x128xf32>
      %21 = arith.addf %18, %20 : vector<2x128xf32>
      %c0_17 = arith.constant 0 : index
      %c0_18 = arith.constant 0 : index
      %22 = vector.load %arg6[%c0_17, %c0_18] : memref<2x128xf32, #tpu.memory_space<vmem>>, vector<2x128xf32>
      tpu.vector_store %arg6[%c0_17, %c0_18], %21 {strides = array<i32>} : memref<2x128xf32, #tpu.memory_space<vmem>>, vector<2x128xf32>,
    } else {
    }
    return
  }
  func.func @transform_0(%arg0: i32, %arg1: i32) -> (i32, i32) {
    %c0_i32 = arith.constant 0 : i32
    return %arg0, %arg1 : i32, i32
  }
  func.func @transform_1(%arg0: i32, %arg1: i32) -> (i32, i32) {
    %c0_i32 = arith.constant 0 : i32
    %c0_i32_0 = arith.constant 0 : i32
    %c0_i32_1 = arith.constant 0 : i32
    return %c0_i32, %c0_i32_0 : i32, i32
  }
  func.func @transform_2(%arg0: i32, %arg1: i32) -> (i32, i32) {
    %c0_i32 = arith.constant 0 : i32
    %c0_i32_0 = arith.constant 0 : i32
    %c0_i32_1 = arith.constant 0 : i32
    return %c0_i32, %c0_i32_0 : i32, i32
  }
  func.func @transform_3(%arg0: i32, %arg1: i32) -> (i32, i32) {
    %c0_i32 = arith.constant 0 : i32
    %c0_i32_0 = arith.constant 0 : i32
    %c0_i32_1 = arith.constant 0 : i32
    return %c0_i32, %c0_i32_0 : i32, i32
  }
  func.func @transform_4(%arg0: i32, %arg1: i32) -> (i32, i32) {
    %c0_i32 = arith.constant 0 : i32
    %c0_i32_0 = arith.constant 0 : i32
    return %arg0, %c0_i32 : i32, i32
  }
}

</mosaic_0001>

<llo_original>
// kernel: fwd.1
$region0: #{fwd.1}
  #allocation0 [shape = 'u32[]', space=smem, size = 0x4, offset = 0x4, fixed_abs, tag = 'smem constant byte address 0x4 - core index']
  #allocation1 [shape = 'u32[72,128]{1,0:T(1,128)}', space=vmem, size = 0x9000, scoped, tag = 'internal scratch']
  #allocation2 [shape = 'f32[8,1]{1,0:T(8,128)}', space=vmem, size = 0x1000, scoped, tag = 'scratch operand']
  %s0 = inlined_call_operand.vmem [shape: bf16[8,256], index: 0, kind: input, shape index: {}]
  %s1 = inlined_call_operand.vmem [shape: f32[8,128], index: 1, kind: input, shape index: {}]
  %s2 = inlined_call_operand.vmem [shape: f32[2,8], index: 2, kind: input, shape index: {}]
  %s3 = inlined_call_operand.vmem [shape: f32[1,128], index: 3, kind: input, shape index: {}]
  %s4 = inlined_call_operand.hbm [shape: f32[2,128], index: 4, kind: output, shape index: {}]
  %s5 = sld [smem:[#allocation0]]
  $region34: #{fwd.1} parent=0
    _
  %s7 = ssub.s32 1, %s5
  %s8 = scalar_select 0, %s7, %s5
  $region1: #{fwd.1} parent=0
    #allocation3 [shape = 'u8[1024]{0}', space=vmem, size = 0x400, scoped, tag = 'output window, operand 0, single buffered']
    #allocation4 [shape = 's32[1]{0}', space=sflag, size = 0x4, scoped, tag = 'scoped memory for fwd.1']
    %9 = vsyncpa [#allocation4], 0
    // Predicated region
    $region2: #{fwd.1} parent=1 // pred_check
      _
    $region3: #{fwd.1} parent=1 // pred_check_branch
      %11 = sbr.rel (0) target = $region5
    $region4: #{fwd.1} parent=1 // pred_region
      _
    $region5: #{fwd.1} parent=1 // pred_fallthru
      _
    // Predicated region
    $region6: #{fwd.1} parent=1 // pred_check
      _
    $region7: #{fwd.1} parent=1 // pred_check_branch
      %13 = sbr.rel (0) target = $region9
    $region8: #{fwd.1} parent=1 // pred_region
      _
    $region9: #{fwd.1} parent=1 // pred_fallthru
      _
    // Predicated region
    $region10: #{fwd.1} parent=1 // pred_check
      _
    $region11: #{fwd.1} parent=1 // pred_check_branch
      %15 = sbr.rel (0) target = $region13
    $region12: #{fwd.1} parent=1 // pred_region
      _
    $region13: #{fwd.1} parent=1 // pred_fallthru
      _
    // Predicated region
    $region14: #{fwd.1} parent=1 // pred_check
      _
    $region15: #{fwd.1} parent=1 // pred_check_branch
      %17 = sbr.rel (0) target = $region17
    $region16: #{fwd.1} parent=1 // pred_region
      _
    $region17: #{fwd.1} parent=1 // pred_fallthru
      _
    %p18 = scmp.eq.s32.totalorder 0, 0
    // Predicated region
    $region18: #{fwd.1} parent=1 // pred_check
      %p19 = pneg %p18
    $region19: #{fwd.1} parent=1 // pred_check_branch
      %21 = sbr.rel (%p19) target = $region21
    $region20: #{fwd.1} parent=1 // pred_region
      %vm22 = vcmask 7168
      %23 = vst.msk [vmem:[#allocation2] sm:$0xff] %vm22, 0.0
    $region21: #{fwd.1} parent=1 // pred_fallthru
      _
    %v24 = vld [vmem:[#allocation2] sm:$0xff]
    %v25 = vld [vmem:[%s0] sm:$0xff]
    %v26 = vunpack.c.l.bf16 %v25
    %v27 = vunpack.c.h.bf16 %v25
    %v28 = vadd.f32 %v26, %v27
    %29 = vadd.xlane.f32.xlu0 %v28
    %v30 = vpop.xlane.xlu0 %29
    %v31 = vadd.f32 %v24, %v30
    %vm32 = vcmask 7168
    %33 = vst.msk [vmem:[#allocation2] sm:$0xff] %vm32, %v31
    // Predicated region
    $region22: #{fwd.1} parent=1 // pred_check
      %p34 = pneg %p18
    $region23: #{fwd.1} parent=1 // pred_check_branch
      %36 = sbr.rel (%p34) target = $region25
    $region24: #{fwd.1} parent=1 // pred_region
      %v37 = vld [vmem:[#allocation2] sm:$0xff]
      %v38 = vld [vmem:[%s1] sm:$0xff]
      %40 = vset.pattern.permute.xlu0 0
      %41 = vperm.xlu0 %40, %v37
      %v42 = vpop.permute.xlu0 %41
      %v44 = vmul.f32 %v42, %v38
      %v45 = vld [vmem:[%s2] sm:$0x3]
      %v46 = vld [vmem:[%s3] sm:$0x1]
      %v48 = vperm.slane %v46, 0
      %vm50 = vcmask 64512
      %v52 = vsel %vm50, %v45, 0
      %54 = vmatpush.msra.mxu0 0.0
      %55 = vmatpush.msra.mxu0 0.0
      %56 = vmatpush.msra.mxu0 0.0
      %57 = vmatpush.msra.mxu0 0.0
      %58 = vmatpush.msra.mxu0 0.0
      %59 = vmatpush.msra.mxu0 0.0
      %60 = vmatpush.msra.mxu0 0.0
      %61 = vmatpush.msra.mxu0 0.0
      %62 = vmatpush.msra.mxu0 0.0
      %63 = vmatpush.msra.mxu0 0.0
      %64 = vmatpush.msra.mxu0 0.0
      %65 = vmatpush.msra.mxu0 0.0
      %66 = vmatpush.msra.mxu0 0.0
      %67 = vmatpush.msra.mxu0 0.0
      %68 = vmatpush.msra.mxu0 0.0
      %69 = vmatpush.msra.mxu0 %v44
      %70 = vmatmul.f32.gmra.mxu0 %v52
      %v71 = vpop.f32.mrf.mxu0
      %v72 = vadd.f32 %v48, %v71
      %73 = vdwg.mxu0
      %74 = vst [vmem:[#allocation3] sm:$0x3] %v72
    $region25: #{fwd.1} parent=1 // pred_fallthru
      _
    // Predicated region
    $region26: #{fwd.1} parent=1 // pred_check
      _
    $region27: #{fwd.1} parent=1 // pred_check_branch
      %76 = sbr.rel (0) target = $region29
    $region28: #{fwd.1} parent=1 // pred_region
      %78 = vsyncadd [#allocation4], 0
      %s80 = sshll.u32 [#allocation3], 4
      %s81 = int_to_ptr.vmem [resolvable:$true] %s80
      %s82 = sshll.u32 %s4, 4
      %s83 = int_to_ptr.hbm [resolvable:$true] %s82
      %85 = dma.vmem_to_hbm [thread:$0]  %s81, 32, %s83, [#allocation4]
    $region29: #{fwd.1} parent=1 // pred_fallthru
      _
    // Predicated region
    $region30: #{fwd.1} parent=1 // pred_check
      _
    $region31: #{fwd.1} parent=1 // pred_check_branch
      %87 = sbr.rel (0) target = $region33
    $region32: #{fwd.1} parent=1 // pred_region
      %89 = dma.done [#allocation4], 32
    $region33: #{fwd.1} parent=1 // pred_fallthru
      _
    %90 = vsyncpa [#allocation4], 1

</llo_original>
